<compile_context>
chip_gen: v6e
topology: v6e:2x2x1
jax: 0.10.0
libtpu: 0.0.40
codegen_flags: <defaults>
</compile_context>

<pallas_src>
import jax
import jax.numpy as jnp
from jax.experimental import pallas as pl
from jax.experimental.pallas import tpu as pltpu


def _make_kernel(d_in: int, hidden: int, d_out: int, chunk: int, n_chunks: int):
    """Kernel over one lane-tile of points; inner loop over `chunk`-lane sub-slabs."""

    def cond_kernel(x_ref, t_ref, w1t_ref, b1t_ref, w2_ref, b2t_ref, psum_ref):
        # x_ref   : (d_in,  tn)    points, lane-dense (tn = n_chunks * chunk)
        # t_ref   : (d_out, tn)    target f(x)
        # w1t_ref : (hidden, d_in)
        # b1t_ref : (hidden, 1)
        # w2_ref  : (hidden, d_out)
        # b2t_ref : (d_out, 1)
        # psum_ref: (1, 128)       per-tile partial sum of the unreduced loss

        # Tiny parameters: load once per tile, live in vregs across all chunks.
        b1 = b1t_ref[...]                                        # (hidden, 1)
        b2 = b2t_ref[...]                                        # (d_out, 1)
        w1_cols = [w1t_ref[:, k:k + 1] for k in range(d_in)]     # each (hidden, 1)
        w2_cols = [w2_ref[:, o:o + 1] for o in range(d_out)]     # each (hidden, 1)

        # Static unroll over lane chunks: only `acc` (<= 4 vregs) is carried, so the
        # (hidden, chunk) intermediates (~16 vregs at hidden=32, chunk=512) stay in
        # registers -- no VMEM spill traffic.
        acc = None                                               # (1, chunk) running error
        for c in range(n_chunks):
            off = c * chunk                                      # static, 128-aligned

            # --- module layer 1: pre = W1^T x + b1 (VPU broadcast MACs) ---------
            pre = None
            for k in range(d_in):                                # d_in is tiny (e.g. 2)
                xk = x_ref[k:k + 1, pl.ds(off, chunk)]           # (1, chunk)
                term = w1_cols[k] * xk                           # -> (hidden, chunk)
                pre = term if pre is None else pre + term
            pre = pre + b1                                       # lane-broadcast add
            h = jnp.tanh(pre)                                    # (hidden, chunk)  EUP

            # --- layer 2 fused with residual_fn / error_fn ----------------------
            # y_o = sum_j W2[j, o] * h[j, :] + b2[o]; multiply fused into the XLU
            # sublane reduce so no named (hidden, chunk) temporary survives.
            e = None
            for o in range(d_out):                               # d_out is tiny (e.g. 1)
                y_o = jnp.sum(w2_cols[o] * h, axis=0, keepdims=True) + b2[o:o + 1, :]
                r = y_o - t_ref[o:o + 1, pl.ds(off, chunk)]      # residual_fn
                sq = r * r                                       # error_fn term
                e = sq if e is None else e + sq                  # (1, chunk)
            acc = e if acc is None else acc + e

        # Fold the (1, chunk) accumulator down to one lane-dense (1, 128) vreg with
        # aligned lane-slice adds (pure VPU, no layout change), then store full-width.
        folded = acc[:, 0:128]
        for j in range(1, chunk // 128):
            folded = folded + acc[:, j * 128:(j + 1) * 128]
        psum_ref[...] = folded

    return cond_kernel


def single_module_condition_forward(x_fm, target_fm, w1, b1, w2, b2, *,
                                    tile_lanes: int = 4096, chunk: int = 512):
    """reduce_fn(error_fn(residual_fn(module(x), f(x)))) as a scalar loss.

    x_fm      : (d_in,  N)  collocation points, feature-major / lane-dense
    target_fm : (d_out, N)  data_function values f(x), feature-major
    w1, b1    : (d_in, hidden), (1, hidden)
    w2, b2    : (hidden, d_out), (1, d_out)
    """
    d_in, n = x_fm.shape
    d_out = target_fm.shape[0]
    hidden = w1.shape[1]
    assert w1.shape == (d_in, hidden)
    assert b1.shape == (1, hidden)
    assert w2.shape == (hidden, d_out)
    assert b2.shape == (1, d_out)
    assert chunk % 128 == 0 and chunk >= 128
    assert n % chunk == 0, "N must be a multiple of the lane chunk"
    # TODO(synk): ragged N (not a multiple of `chunk`) needs tail padding + masking of
    # the padded lanes so they don't contribute to the mean.

    n_chunks_total = n // chunk
    # Grid size: smallest g with tile <= tile_lanes, but at least 2 steps when there is
    # enough work (v7x megacore: the "parallel" axis is sharded across both TCs), and g
    # must divide the chunk count so every tile is a whole number of chunks.
    g = max(1, min(n_chunks_total, -(-n // tile_lanes)))
    if n_chunks_total >= 2:
        g = max(g, 2)
    while n_chunks_total % g:
        g += 1
    tn = n // g
    n_chunks = tn // chunk

    # Tiny parameter re-layouts (a few hundred bytes; negligible vs. the point stream).
    w1t = w1.T                   # (hidden, d_in)
    b1t = b1.T                   # (hidden, 1)
    b2t = b2.T                   # (d_out, 1)

    kernel = _make_kernel(d_in, hidden, d_out, chunk, n_chunks)

    psums = pl.pallas_call(
        kernel,
        out_shape=jax.ShapeDtypeStruct((1, g * 128), jnp.float32),
        grid=(g,),
        in_specs=[
            pl.BlockSpec((d_in, tn), lambda i: (0, i)),       # x tile (streamed)
            pl.BlockSpec((d_out, tn), lambda i: (0, i)),      # target tile (streamed)
            pl.BlockSpec((hidden, d_in), lambda i: (0, 0)),   # W1^T (resident)
            pl.BlockSpec((hidden, 1), lambda i: (0, 0)),      # b1
            pl.BlockSpec((hidden, d_out), lambda i: (0, 0)),  # W2
            pl.BlockSpec((d_out, 1), lambda i: (0, 0)),       # b2
        ],
        out_specs=pl.BlockSpec((1, 128), lambda i: (0, i)),   # per-tile partial sums
        compiler_params=pltpu.CompilerParams(
            dimension_semantics=("parallel",),  # disjoint outputs, no carried state
        ),
    )(x_fm, target_fm, w1t, b1t, w2, b2t)

    # reduce_fn (torch.mean default): tiny final reduction over g*128 partial sums.
    # TODO(synk): the condition `weight`, learnable Parameter, adaptive-sampler feedback
    # and input-gradient tracking are training-framework plumbing, not kernel compute.
    return jnp.sum(psums) / n


def _reference_forward(x_fm, target_fm, w1, b1, w2, b2):
    x = x_fm.T                    # (N, d_in)
    t = target_fm.T               # (N, d_out)
    h = jnp.tanh(x @ w1 + b1)
    y = h @ w2 + b2
    r = y - t
    return jnp.mean(jnp.sum(r * r, axis=1))


if __name__ == "__main__":
    key = jax.random.PRNGKey(0)
    k_x, k_w1, k_b1, k_w2, k_b2, k_x2 = jax.random.split(key, 6)

    N, D_IN, HIDDEN, D_OUT = 512, 2, 32, 1

    # "sampler.sample_points()": static points in [0,1]^2, emitted feature-major
    # (d_in, N) so the kernel streams them directly (no transpose pass).
    x_fm = jax.random.uniform(k_x, (D_IN, N), dtype=jnp.float32)

    # module parameters (deterministic synthetic init)
    w1 = jax.random.normal(k_w1, (D_IN, HIDDEN), dtype=jnp.float32) * 0.5
    b1 = jax.random.normal(k_b1, (1, HIDDEN), dtype=jnp.float32) * 0.1
    w2 = jax.random.normal(k_w2, (HIDDEN, D_OUT), dtype=jnp.float32) * 0.5
    b2 = jax.random.normal(k_b2, (1, D_OUT), dtype=jnp.float32) * 0.1

    # data_functions: target f(x) evaluated on the sampled points, feature-major
    target_fm = (jnp.sin(jnp.pi * x_fm[0:1, :]) * jnp.sin(jnp.pi * x_fm[1:2, :])
                 ).astype(jnp.float32)

    ref = _reference_forward(x_fm, target_fm, w1, b1, w2, b2)

    # 1) Default path: single tile, single chunk (grid=(1,)).
    loss = single_module_condition_forward(x_fm, target_fm, w1, b1, w2, b2)
    loss = jax.block_until_ready(loss)
    assert jnp.allclose(loss, ref, rtol=2e-4, atol=1e-6), (loss, ref)

    # 2) Multi-tile "parallel" path: tn = 128, grid = (4,).
    loss_tiled = single_module_condition_forward(
        x_fm, target_fm, w1, b1, w2, b2, tile_lanes=128, chunk=128)
    loss_tiled = jax.block_until_ready(loss_tiled)
    assert jnp.allclose(loss_tiled, ref, rtol=2e-4, atol=1e-6), (loss_tiled, ref)

    # 3) Larger N: even grid for megacore (grid=(2,)) + multi-chunk inner loop
    #    (tn = 2048, 4 chunks of 512 lanes per tile).
    N2 = 4096
    x2_fm = jax.random.uniform(k_x2, (D_IN, N2), dtype=jnp.float32)
    t2_fm = (jnp.sin(jnp.pi * x2_fm[0:1, :]) * jnp.sin(jnp.pi * x2_fm[1:2, :])
             ).astype(jnp.float32)
    ref2 = _reference_forward(x2_fm, t2_fm, w1, b1, w2, b2)
    loss2 = single_module_condition_forward(
        x2_fm, t2_fm, w1, b1, w2, b2, tile_lanes=2048, chunk=512)
    loss2 = jax.block_until_ready(loss2)
    assert jnp.allclose(loss2, ref2, rtol=2e-4, atol=1e-6), (loss2, ref2)

    print("KERNEL_OK")
</pallas_src>

<mosaic_0001>
module attributes {stable_mosaic.version = 11 : i64} {
  func.func @cond_kernel(%arg0: i32, %arg1: memref<2x512xf32, #tpu.memory_space<vmem>>, %arg2: memref<1x512xf32, #tpu.memory_space<vmem>>, %arg3: memref<32x2xf32, #tpu.memory_space<vmem>>, %arg4: memref<32x1xf32, #tpu.memory_space<vmem>>, %arg5: memref<32x1xf32, #tpu.memory_space<vmem>>, %arg6: memref<1x1xf32, #tpu.memory_space<vmem>>, %arg7: memref<1x128xf32, #tpu.memory_space<vmem>>) attributes {dimension_semantics = [#tpu.dimension_semantics<parallel>], iteration_bounds = array<i64: 1>, scalar_prefetch = 0 : i64, scratch_operands = 0 : i64, tpu.core_type = #tpu.core_type<tc>, window_params = [{transform_indices = @transform_0, window_bounds = array<i64: 2, 512>}, {transform_indices = @transform_1, window_bounds = array<i64: 1, 512>}, {pipeline_mode = #tpu.pipeline_mode<synchronous>, transform_indices = @transform_2, window_bounds = array<i64: 32, 2>}, {pipeline_mode = #tpu.pipeline_mode<synchronous>, transform_indices = @transform_3, window_bounds = array<i64: 32, 1>}, {pipeline_mode = #tpu.pipeline_mode<synchronous>, transform_indices = @transform_4, window_bounds = array<i64: 32, 1>}, {pipeline_mode = #tpu.pipeline_mode<synchronous>, transform_indices = @transform_5, window_bounds = array<i64: 1, 1>}, {transform_indices = @transform_6, window_bounds = array<i64: 1, 128>}]} {
    %c0 = arith.constant 0 : index
    %c0_0 = arith.constant 0 : index
    %0 = vector.load %arg4[%c0, %c0_0] : memref<32x1xf32, #tpu.memory_space<vmem>>, vector<32x1xf32>
    %c0_1 = arith.constant 0 : index
    %c0_2 = arith.constant 0 : index
    %1 = vector.load %arg6[%c0_1, %c0_2] : memref<1x1xf32, #tpu.memory_space<vmem>>, vector<1x1xf32>
    %c0_3 = arith.constant 0 : index
    %c0_4 = arith.constant 0 : index
    %2 = vector.load %arg3[%c0_3, %c0_4] : memref<32x2xf32, #tpu.memory_space<vmem>>, vector<32x1xf32>
    %c0_5 = arith.constant 0 : index
    %c1 = arith.constant 1 : index
    %3 = vector.load %arg3[%c0_5, %c1] : memref<32x2xf32, #tpu.memory_space<vmem>>, vector<32x1xf32>
    %c0_6 = arith.constant 0 : index
    %c0_7 = arith.constant 0 : index
    %4 = vector.load %arg5[%c0_6, %c0_7] : memref<32x1xf32, #tpu.memory_space<vmem>>, vector<32x1xf32>
    %c0_8 = arith.constant 0 : index
    %c0_9 = arith.constant 0 : index
    %5 = vector.load %arg1[%c0_8, %c0_9] : memref<2x512xf32, #tpu.memory_space<vmem>>, vector<1x512xf32>
    %6 = vector.broadcast %2 : vector<32x1xf32> to vector<32x512xf32>
    %7 = vector.broadcast %5 : vector<1x512xf32> to vector<32x512xf32>
    %8 = arith.mulf %6, %7 : vector<32x512xf32>
    %c1_10 = arith.constant 1 : index
    %c0_11 = arith.constant 0 : index
    %9 = vector.load %arg1[%c1_10, %c0_11] : memref<2x512xf32, #tpu.memory_space<vmem>>, vector<1x512xf32>
    %10 = vector.broadcast %3 : vector<32x1xf32> to vector<32x512xf32>
    %11 = vector.broadcast %9 : vector<1x512xf32> to vector<32x512xf32>
    %12 = arith.mulf %10, %11 : vector<32x512xf32>
    %13 = arith.addf %8, %12 : vector<32x512xf32>
    %14 = vector.broadcast %0 : vector<32x1xf32> to vector<32x512xf32>
    %15 = arith.addf %13, %14 : vector<32x512xf32>
    %16 = math.tanh %15 : vector<32x512xf32>
    %17 = vector.broadcast %4 : vector<32x1xf32> to vector<32x512xf32>
    %18 = arith.mulf %17, %16 : vector<32x512xf32>
    %cst = arith.constant dense<0.000000e+00> : vector<512xf32>
    %19 = vector.multi_reduction <add>, %18, %cst [0] : vector<32x512xf32> to vector<512xf32>
    %20 = vector.shape_cast %19 : vector<512xf32> to vector<1x512xf32>
    %21 = vector.broadcast %1 : vector<1x1xf32> to vector<1x512xf32>
    %22 = arith.addf %20, %21 : vector<1x512xf32>
    %c0_12 = arith.constant 0 : index
    %c0_13 = arith.constant 0 : index
    %23 = vector.load %arg2[%c0_12, %c0_13] : memref<1x512xf32, #tpu.memory_space<vmem>>, vector<1x512xf32>
    %24 = arith.subf %22, %23 : vector<1x512xf32>
    %25 = arith.mulf %24, %24 : vector<1x512xf32>
    %26 = vector.extract_strided_slice %25 {offsets = [0, 0], sizes = [1, 128], strides = [1, 1]} : vector<1x512xf32> to vector<1x128xf32>
    %27 = vector.extract_strided_slice %25 {offsets = [0, 128], sizes = [1, 128], strides = [1, 1]} : vector<1x512xf32> to vector<1x128xf32>
    %28 = arith.addf %26, %27 : vector<1x128xf32>
    %29 = vector.extract_strided_slice %25 {offsets = [0, 256], sizes = [1, 128], strides = [1, 1]} : vector<1x512xf32> to vector<1x128xf32>
    %30 = arith.addf %28, %29 : vector<1x128xf32>
    %31 = vector.extract_strided_slice %25 {offsets = [0, 384], sizes = [1, 128], strides = [1, 1]} : vector<1x512xf32> to vector<1x128xf32>
    %32 = arith.addf %30, %31 : vector<1x128xf32>
    %c0_14 = arith.constant 0 : index
    %c0_15 = arith.constant 0 : index
    %33 = vector.load %arg7[%c0_14, %c0_15] : memref<1x128xf32, #tpu.memory_space<vmem>>, vector<1x128xf32>
    tpu.vector_store %arg7[%c0_14, %c0_15], %32 {strides = array<i32>} : memref<1x128xf32, #tpu.memory_space<vmem>>, vector<1x128xf32>,
    return
  }
  func.func @transform_0(%arg0: i32) -> (i32, i32) {
    %c0_i32 = arith.constant 0 : i32
    %c0_i32_0 = arith.constant 0 : i32
    return %c0_i32, %arg0 : i32, i32
  }
  func.func @transform_1(%arg0: i32) -> (i32, i32) {
    %c0_i32 = arith.constant 0 : i32
    %c0_i32_0 = arith.constant 0 : i32
    return %c0_i32, %arg0 : i32, i32
  }
  func.func @transform_2(%arg0: i32) -> (i32, i32) {
    %c0_i32 = arith.constant 0 : i32
    %c0_i32_0 = arith.constant 0 : i32
    %c0_i32_1 = arith.constant 0 : i32
    return %c0_i32, %c0_i32_0 : i32, i32
  }
  func.func @transform_3(%arg0: i32) -> (i32, i32) {
    %c0_i32 = arith.constant 0 : i32
    %c0_i32_0 = arith.constant 0 : i32
    %c0_i32_1 = arith.constant 0 : i32
    return %c0_i32, %c0_i32_0 : i32, i32
  }
  func.func @transform_4(%arg0: i32) -> (i32, i32) {
    %c0_i32 = arith.constant 0 : i32
    %c0_i32_0 = arith.constant 0 : i32
    %c0_i32_1 = arith.constant 0 : i32
    return %c0_i32, %c0_i32_0 : i32, i32
  }
  func.func @transform_5(%arg0: i32) -> (i32, i32) {
    %c0_i32 = arith.constant 0 : i32
    %c0_i32_0 = arith.constant 0 : i32
    %c0_i32_1 = arith.constant 0 : i32
    return %c0_i32, %c0_i32_0 : i32, i32
  }
  func.func @transform_6(%arg0: i32) -> (i32, i32) {
    %c0_i32 = arith.constant 0 : i32
    %c0_i32_0 = arith.constant 0 : i32
    return %c0_i32, %arg0 : i32, i32
  }
}

</mosaic_0001>

<llo_original>
// kernel: tpu_custom_call.1
$region0: #{tpu_custom_call.1}
  #allocation0 [shape = 'u32[]', space=smem, size = 0x4, offset = 0x4, fixed_abs, tag = 'smem constant byte address 0x4 - core index']
  #allocation1 [shape = 'u32[144,128]{1,0:T(1,128)}', space=vmem, size = 0x12000, scoped, tag = 'internal scratch']
  #allocation2 [shape = 'f32[1,1]{1,0:T(1,128)S(1)}', space=vmem, size = 0x200, scoped, tag = 'scoped memory for tpu_custom_call.1']
  %s0 = inlined_call_operand.vmem [shape: f32[2,512], index: 0, kind: input, shape index: {}]
  %s1 = inlined_call_operand.vmem [shape: f32[1,512], index: 1, kind: input, shape index: {}]
  %s2 = inlined_call_operand.vmem [shape: f32[32,2], index: 2, kind: input, shape index: {}]
  %s3 = inlined_call_operand.vmem [shape: f32[32,1], index: 3, kind: input, shape index: {}]
  %s4 = inlined_call_operand.vmem [shape: f32[32,1], index: 4, kind: input, shape index: {}]
  %s5 = inlined_call_operand.<no memory space> [shape: f32[1,1], index: 5, kind: input, shape index: {}]
  %s6 = inlined_call_operand.hbm [shape: f32[1,128], index: 6, kind: output, shape index: {}]
  %s7 = sld [smem:[#allocation0]]
  $region34: #{tpu_custom_call.1} parent=0
    _
  %s9 = ssub.s32 1, %s7
  %s10 = scalar_select 0, %s9, %s7
  %v11 = vstv %s5
  %12 = vst [vmem:[#allocation2] sm:$0x1] %v11
  $region1: #{tpu_custom_call.1} parent=0
    #allocation3 [shape = 'u8[512]{0}', space=vmem, size = 0x400, scoped, tag = 'output window, operand 0, single buffered']
    #allocation4 [shape = 's32[1]{0}', space=sflag, size = 0x4, scoped, tag = 'scoped memory for tpu_custom_call.1']
    %13 = vsyncpa [#allocation4], 0
    // Predicated region
    $region2: #{tpu_custom_call.1} parent=1 // pred_check
      _
    $region3: #{tpu_custom_call.1} parent=1 // pred_check_branch
      %15 = sbr.rel (0) target = $region5
    $region4: #{tpu_custom_call.1} parent=1 // pred_region
      _
    $region5: #{tpu_custom_call.1} parent=1 // pred_fallthru
      _
    // Predicated region
    $region6: #{tpu_custom_call.1} parent=1 // pred_check
      _
    $region7: #{tpu_custom_call.1} parent=1 // pred_check_branch
      %17 = sbr.rel (0) target = $region9
    $region8: #{tpu_custom_call.1} parent=1 // pred_region
      _
    $region9: #{tpu_custom_call.1} parent=1 // pred_fallthru
      _
    // Predicated region
    $region10: #{tpu_custom_call.1} parent=1 // pred_check
      _
    $region11: #{tpu_custom_call.1} parent=1 // pred_check_branch
      %19 = sbr.rel (0) target = $region13
    $region12: #{tpu_custom_call.1} parent=1 // pred_region
      _
    $region13: #{tpu_custom_call.1} parent=1 // pred_fallthru
      _
    // Predicated region
    $region14: #{tpu_custom_call.1} parent=1 // pred_check
      _
    $region15: #{tpu_custom_call.1} parent=1 // pred_check_branch
      %21 = sbr.rel (0) target = $region17
    $region16: #{tpu_custom_call.1} parent=1 // pred_region
      _
    $region17: #{tpu_custom_call.1} parent=1 // pred_fallthru
      _
    // Predicated region
    $region18: #{tpu_custom_call.1} parent=1 // pred_check
      _
    $region19: #{tpu_custom_call.1} parent=1 // pred_check_branch
      %23 = sbr.rel (0) target = $region21
    $region20: #{tpu_custom_call.1} parent=1 // pred_region
      _
    $region21: #{tpu_custom_call.1} parent=1 // pred_fallthru
      _
    // Predicated region
    $region22: #{tpu_custom_call.1} parent=1 // pred_check
      _
    $region23: #{tpu_custom_call.1} parent=1 // pred_check_branch
      %25 = sbr.rel (0) target = $region25
    $region24: #{tpu_custom_call.1} parent=1 // pred_region
      _
    $region25: #{tpu_custom_call.1} parent=1 // pred_fallthru
      _
    %v26 = vld [vmem:[%s3] sm:$0xff]
    %v27 = vld [vmem:[%s3 + $0x8] sm:$0xff]
    %v28 = vld [vmem:[%s3 + $0x10] sm:$0xff]
    %v29 = vld [vmem:[%s3 + $0x18] sm:$0xff]
    %v30 = vld [vmem:[#allocation2] sm:$0x1]
    %v31 = vld [vmem:[%s2] sm:$0xff]
    %v32 = vld [vmem:[%s2 + $0x8] sm:$0xff]
    %v33 = vld [vmem:[%s2 + $0x10] sm:$0xff]
    %v34 = vld [vmem:[%s2 + $0x18] sm:$0xff]
    %v35 = vld [vmem:[%s4] sm:$0xff]
    %v36 = vld [vmem:[%s4 + $0x8] sm:$0xff]
    %v37 = vld [vmem:[%s4 + $0x10] sm:$0xff]
    %v38 = vld [vmem:[%s4 + $0x18] sm:$0xff]
    %v39 = vld [vmem:[%s0] ss:$2 sm:$0xf]
    %41 = vset.pattern.permute.xlu0 0
    %42 = vperm.xlu0 %41, %v31
    %v43 = vpop.permute.xlu0 %42
    %46 = vset.pattern.permute.xlu0 0
    %47 = vperm.xlu0 %46, %v32
    %v48 = vpop.permute.xlu0 %47
    %51 = vset.pattern.permute.xlu0 0
    %52 = vperm.xlu0 %51, %v33
    %v53 = vpop.permute.xlu0 %52
    %56 = vset.pattern.permute.xlu0 0
    %57 = vperm.xlu0 %56, %v34
    %v58 = vpop.permute.xlu0 %57
    %v61 = vlaneseq
    %v62 = vshrl.u32 %v61, 7
    %v63 = vsub.s32 0, %v62
    %v64 = vrot.slane %v39, %v63
    %v65 = vlaneseq
    %v66 = vshrl.u32 %v65, 7
    %v67 = vsub.s32 1, %v66
    %v68 = vrot.slane %v39, %v67
    %v69 = vlaneseq
    %v70 = vshrl.u32 %v69, 7
    %v71 = vsub.s32 2, %v70
    %v72 = vrot.slane %v39, %v71
    %v73 = vlaneseq
    %v74 = vshrl.u32 %v73, 7
    %v75 = vsub.s32 3, %v74
    %v76 = vrot.slane %v39, %v75
    %v81 = vmul.f32 %v43, %v64
    %v82 = vmul.f32 %v43, %v68
    %v83 = vmul.f32 %v43, %v72
    %v84 = vmul.f32 %v43, %v76
    %v85 = vmul.f32 %v48, %v64
    %v86 = vmul.f32 %v48, %v68
    %v87 = vmul.f32 %v48, %v72
    %v88 = vmul.f32 %v48, %v76
    %v89 = vmul.f32 %v53, %v64
    %v90 = vmul.f32 %v53, %v68
    %v91 = vmul.f32 %v53, %v72
    %v92 = vmul.f32 %v53, %v76
    %v93 = vmul.f32 %v58, %v64
    %v94 = vmul.f32 %v58, %v68
    %v95 = vmul.f32 %v58, %v72
    %v96 = vmul.f32 %v58, %v76
    %s97 = scalar_lea.vmem %s0, 1
    %v98 = vld [vmem:[%s97] ss:$2 sm:$0xf]
    %99 = vset.pattern.permute.xlu0 1
    %100 = vperm.xlu0 %99, %v31
    %v101 = vpop.permute.xlu0 %100
    %103 = vset.pattern.permute.xlu0 1
    %104 = vperm.xlu0 %103, %v32
    %v105 = vpop.permute.xlu0 %104
    %107 = vset.pattern.permute.xlu0 1
    %108 = vperm.xlu0 %107, %v33
    %v109 = vpop.permute.xlu0 %108
    %111 = vset.pattern.permute.xlu0 1
    %112 = vperm.xlu0 %111, %v34
    %v113 = vpop.permute.xlu0 %112
    %v116 = vlaneseq
    %v117 = vshrl.u32 %v116, 7
    %v118 = vsub.s32 0, %v117
    %v119 = vrot.slane %v98, %v118
    %v120 = vlaneseq
    %v121 = vshrl.u32 %v120, 7
    %v122 = vsub.s32 1, %v121
    %v123 = vrot.slane %v98, %v122
    %v124 = vlaneseq
    %v125 = vshrl.u32 %v124, 7
    %v126 = vsub.s32 2, %v125
    %v127 = vrot.slane %v98, %v126
    %v128 = vlaneseq
    %v129 = vshrl.u32 %v128, 7
    %v130 = vsub.s32 3, %v129
    %v131 = vrot.slane %v98, %v130
    %v136 = vmul.f32 %v101, %v119
    %v137 = vmul.f32 %v101, %v123
    %v138 = vmul.f32 %v101, %v127
    %v139 = vmul.f32 %v101, %v131
    %v140 = vmul.f32 %v105, %v119
    %v141 = vmul.f32 %v105, %v123
    %v142 = vmul.f32 %v105, %v127
    %v143 = vmul.f32 %v105, %v131
    %v144 = vmul.f32 %v109, %v119
    %v145 = vmul.f32 %v109, %v123
    %v146 = vmul.f32 %v109, %v127
    %v147 = vmul.f32 %v109, %v131
    %v148 = vmul.f32 %v113, %v119
    %v149 = vmul.f32 %v113, %v123
    %v150 = vmul.f32 %v113, %v127
    %v151 = vmul.f32 %v113, %v131
    %v152 = vadd.f32 %v81, %v136
    %v153 = vadd.f32 %v82, %v137
    %v154 = vadd.f32 %v83, %v138
    %v155 = vadd.f32 %v84, %v139
    %v156 = vadd.f32 %v85, %v140
    %v157 = vadd.f32 %v86, %v141
    %v158 = vadd.f32 %v87, %v142
    %v159 = vadd.f32 %v88, %v143
    %v160 = vadd.f32 %v89, %v144
    %v161 = vadd.f32 %v90, %v145
    %v162 = vadd.f32 %v91, %v146
    %v163 = vadd.f32 %v92, %v147
    %v164 = vadd.f32 %v93, %v148
    %v165 = vadd.f32 %v94, %v149
    %v166 = vadd.f32 %v95, %v150
    %v167 = vadd.f32 %v96, %v151
    %169 = vset.pattern.permute.xlu0 0
    %170 = vperm.xlu0 %169, %v26
    %v171 = vpop.permute.xlu0 %170
    %174 = vset.pattern.permute.xlu0 0
    %175 = vperm.xlu0 %174, %v27
    %v176 = vpop.permute.xlu0 %175
    %179 = vset.pattern.permute.xlu0 0
    %180 = vperm.xlu0 %179, %v28
    %v181 = vpop.permute.xlu0 %180
    %184 = vset.pattern.permute.xlu0 0
    %185 = vperm.xlu0 %184, %v29
    %v186 = vpop.permute.xlu0 %185
    %v188 = vadd.f32 %v152, %v171
    %v189 = vadd.f32 %v153, %v171
    %v190 = vadd.f32 %v154, %v171
    %v191 = vadd.f32 %v155, %v171
    %v192 = vadd.f32 %v156, %v176
    %v193 = vadd.f32 %v157, %v176
    %v194 = vadd.f32 %v158, %v176
    %v195 = vadd.f32 %v159, %v176
    %v196 = vadd.f32 %v160, %v181
    %v197 = vadd.f32 %v161, %v181
    %v198 = vadd.f32 %v162, %v181
    %v199 = vadd.f32 %v163, %v181
    %v200 = vadd.f32 %v164, %v186
    %v201 = vadd.f32 %v165, %v186
    %v202 = vadd.f32 %v166, %v186
    %v203 = vadd.f32 %v167, %v186
    %v204 = vtanh.pop %v188
    %v205 = vtanh.pop %v189
    %v206 = vtanh.pop %v190
    %v207 = vtanh.pop %v191
    %v208 = vtanh.pop %v192
    %v209 = vtanh.pop %v193
    %v210 = vtanh.pop %v194
    %v211 = vtanh.pop %v195
    %v212 = vtanh.pop %v196
    %v213 = vtanh.pop %v197
    %v214 = vtanh.pop %v198
    %v215 = vtanh.pop %v199
    %v216 = vtanh.pop %v200
    %v217 = vtanh.pop %v201
    %v218 = vtanh.pop %v202
    %v219 = vtanh.pop %v203
    %221 = vset.pattern.permute.xlu0 0
    %222 = vperm.xlu0 %221, %v35
    %v223 = vpop.permute.xlu0 %222
    %226 = vset.pattern.permute.xlu0 0
    %227 = vperm.xlu0 %226, %v36
    %v228 = vpop.permute.xlu0 %227
    %231 = vset.pattern.permute.xlu0 0
    %232 = vperm.xlu0 %231, %v37
    %v233 = vpop.permute.xlu0 %232
    %236 = vset.pattern.permute.xlu0 0
    %237 = vperm.xlu0 %236, %v38
    %v238 = vpop.permute.xlu0 %237
    %v240 = vmul.f32 %v223, %v204
    %v241 = vmul.f32 %v223, %v205
    %v242 = vmul.f32 %v223, %v206
    %v243 = vmul.f32 %v223, %v207
    %v244 = vmul.f32 %v228, %v208
    %v245 = vmul.f32 %v228, %v209
    %v246 = vmul.f32 %v228, %v210
    %v247 = vmul.f32 %v228, %v211
    %v248 = vmul.f32 %v233, %v212
    %v249 = vmul.f32 %v233, %v213
    %v250 = vmul.f32 %v233, %v214
    %v251 = vmul.f32 %v233, %v215
    %v252 = vmul.f32 %v238, %v216
    %v253 = vmul.f32 %v238, %v217
    %v254 = vmul.f32 %v238, %v218
    %v255 = vmul.f32 %v238, %v219
    %v256 = vadd.f32 %v240, %v244
    %v257 = vadd.f32 %v256, %v248
    %v258 = vadd.f32 %v257, %v252
    %v259 = vrot.slane %v258, 4
    %v260 = vadd.f32 %v258, %v259
    %v261 = vrot.slane %v260, 2
    %v262 = vadd.f32 %v260, %v261
    %v263 = vrot.slane %v262, 1
    %v264 = vadd.f32 %v262, %v263
    %v265 = vadd.f32 %v241, %v245
    %v266 = vadd.f32 %v265, %v249
    %v267 = vadd.f32 %v266, %v253
    %v268 = vrot.slane %v267, 4
    %v269 = vadd.f32 %v267, %v268
    %v270 = vrot.slane %v269, 2
    %v271 = vadd.f32 %v269, %v270
    %v272 = vrot.slane %v271, 1
    %v273 = vadd.f32 %v271, %v272
    %v274 = vadd.f32 %v242, %v246
    %v275 = vadd.f32 %v274, %v250
    %v276 = vadd.f32 %v275, %v254
    %v277 = vrot.slane %v276, 4
    %v278 = vadd.f32 %v276, %v277
    %v279 = vrot.slane %v278, 2
    %v280 = vadd.f32 %v278, %v279
    %v281 = vrot.slane %v280, 1
    %v282 = vadd.f32 %v280, %v281
    %v283 = vadd.f32 %v243, %v247
    %v284 = vadd.f32 %v283, %v251
    %v285 = vadd.f32 %v284, %v255
    %v286 = vrot.slane %v285, 4
    %v287 = vadd.f32 %v285, %v286
    %v288 = vrot.slane %v287, 2
    %v289 = vadd.f32 %v287, %v288
    %v290 = vrot.slane %v289, 1
    %v291 = vadd.f32 %v289, %v290
    %293 = vset.pattern.permute.xlu0 0
    %294 = vperm.xlu0 %293, %v30
    %v295 = vpop.permute.xlu0 %294
    %v297 = vlaneseq
    %v298 = vshrl.u32 %v297, 7
    %v299 = vsub.s32 0, %v298
    %v300 = vrot.slane %v295, %v299
    %v301 = vadd.f32 %v264, %v300
    %v302 = vadd.f32 %v273, %v300
    %v303 = vadd.f32 %v282, %v300
    %v304 = vadd.f32 %v291, %v300
    %v305 = vld [vmem:[%s1] sm:$0xf]
    %v307 = vlaneseq
    %v308 = vshrl.u32 %v307, 7
    %v309 = vsub.s32 0, %v308
    %v310 = vrot.slane %v305, %v309
    %v311 = vlaneseq
    %v312 = vshrl.u32 %v311, 7
    %v313 = vsub.s32 1, %v312
    %v314 = vrot.slane %v305, %v313
    %v315 = vlaneseq
    %v316 = vshrl.u32 %v315, 7
    %v317 = vsub.s32 2, %v316
    %v318 = vrot.slane %v305, %v317
    %v319 = vlaneseq
    %v320 = vshrl.u32 %v319, 7
    %v321 = vsub.s32 3, %v320
    %v322 = vrot.slane %v305, %v321
    %v327 = vsub.f32 %v301, %v310
    %v328 = vsub.f32 %v302, %v314
    %v329 = vsub.f32 %v303, %v318
    %v330 = vsub.f32 %v304, %v322
    %v331 = vmul.f32 %v327, %v327
    %v332 = vmul.f32 %v328, %v328
    %v333 = vmul.f32 %v329, %v329
    %v334 = vmul.f32 %v330, %v330
    %v335 = vadd.f32 %v331, %v332
    %v336 = vadd.f32 %v335, %v333
    %v337 = vadd.f32 %v336, %v334
    %338 = vst [vmem:[#allocation3] sm:$0x1] %v337
    // Predicated region
    $region26: #{tpu_custom_call.1} parent=1 // pred_check
      _
    $region27: #{tpu_custom_call.1} parent=1 // pred_check_branch
      %340 = sbr.rel (0) target = $region29
    $region28: #{tpu_custom_call.1} parent=1 // pred_region
      %s342 = ssub.s32 16, 16
      %343 = vsyncadd [#allocation4], %s342
      %s345 = sshll.u32 [#allocation3], 4
      %s346 = int_to_ptr.vmem [resolvable:$true] %s345
      %348 = dma.vmem_to_hbm [thread:$0]  %s346, 16, %s6, [#allocation4]
    $region29: #{tpu_custom_call.1} parent=1 // pred_fallthru
      _
    // Predicated region
    $region30: #{tpu_custom_call.1} parent=1 // pred_check
      _
    $region31: #{tpu_custom_call.1} parent=1 // pred_check_branch
      %350 = sbr.rel (0) target = $region33
    $region32: #{tpu_custom_call.1} parent=1 // pred_region
      %351 = dma.done [#allocation4], 16
    $region33: #{tpu_custom_call.1} parent=1 // pred_fallthru
      _
    %352 = vsyncpa [#allocation4], 1

</llo_original>
